<compile_context>
chip_gen: v5e
topology: v5e:2x2
jax: 0.10.0
libtpu: 0.0.40
codegen_flags: <defaults>
</compile_context>

<pallas_src>
import functools
import math

import jax
import jax.numpy as jnp
from jax.experimental import pallas as pl
from jax.experimental.pallas import tpu as pltpu


def _l1_norm_skinny_kernel(x_ref, g_ref, e_ref, o_ref, *, neg_input_possible: bool):
    """Lane-dense path.

    x_ref: [B_TILE, dim] flat slab (dim on lanes)
    g_ref: [dim, n_row]  bf16, G[i, j] = 1 iff i // k == j
    e_ref: [n_row, dim]  bf16, E[j, i] = 1 iff i // k == j
    """
    x = x_ref[...].astype(jnp.float32)
    if neg_input_possible:
        x = jnp.maximum(x, 0.0)
        absx = x  # post-ReLU values are already non-negative
    else:
        absx = jnp.abs(x)
    # Per-group L1 sums via a skinny MXU matmul (bf16 operands, f32 accumulate).
    group_sums = jnp.dot(
        absx.astype(jnp.bfloat16), g_ref[...], preferred_element_type=jnp.float32
    )
    # Clamp (F.normalize eps) BEFORE the reciprocal, on the tiny [B, n_row] array.
    recip = 1.0 / jnp.maximum(group_sums, 1e-12)
    # Broadcast reciprocals back to lane-dense [B_TILE, dim] with a second
    # skinny matmul (pure copy per column, so bf16 only quantizes recip).
    recip_b = jnp.dot(
        recip.astype(jnp.bfloat16), e_ref[...], preferred_element_type=jnp.float32
    )
    o_ref[...] = (x * recip_b).astype(o_ref.dtype)


def _l1_norm_rowwise_kernel(x_ref, o_ref, *, neg_input_possible: bool):
    """Fallback path: x_ref [B_TILE, n_row, k], k already lane-dense (k >= 128)."""
    x = x_ref[...].astype(jnp.float32)
    if neg_input_possible:
        x = jnp.maximum(x, 0.0)
        absx = x
    else:
        absx = jnp.abs(x)
    denom = jnp.maximum(jnp.sum(absx, axis=-1, keepdims=True), 1e-12)
    o_ref[...] = (x / denom).astype(o_ref.dtype)


def _sublane_multiple(itemsize):
    # Packed dtypes tile sublanes as (16,128)/(32,128).
    return {4: 8, 2: 16, 1: 32}.get(int(itemsize), 8)


def _pick_batch_tile(batch, row_bytes, itemsize, target_block_bytes):
    """~target_block_bytes per block, sublane-aligned, >= 4 grid steps when possible."""
    sub = _sublane_multiple(itemsize)
    if batch <= sub:
        return batch  # full extent -> always a legal block dim
    target_rows = max(1, target_block_bytes // max(row_bytes, 1))
    b_tile = min(int(target_rows), batch)
    b_tile = max(sub, (b_tile // sub) * sub)
    # Keep >= 4 grid steps when batch permits: feeds both v7x TensorCores
    # (dimension_semantics="parallel") and gives the pipeline DMA/compute overlap.
    if batch >= 4 * sub:
        cap = max(sub, ((batch // 4) // sub) * sub)
        b_tile = min(b_tile, cap)
    return b_tile


def matrix_sum_regularizer_forward(
    embeddings,
    k,
    neg_input_possible=False,
    *,
    target_block_bytes=6 * 1024 * 1024,        # ~6 MiB blocks: amortizes per-step overhead
    max_const_buffered_bytes=24 * 1024 * 1024, # cap for double-buffered bf16 G + E constants
):
    """embeddings: [batch, dim] with dim % k == 0. Returns [batch, dim]."""
    batch, dim = embeddings.shape
    assert dim % k == 0, "k must divide the embedding dim"
    n_row = dim // k
    itemsize = jnp.dtype(embeddings.dtype).itemsize

    use_matmul_path = k < 128
    fold = 1
    batch2, dim2, n_row2, const_buffered = batch, dim, n_row, 0
    if use_matmul_path:
        # Lane-dense repack: fold whole batch rows into the lane axis (free
        # reshape; groups stay contiguous with the same period) so the output
        # last dim is a multiple of 128 -> unmasked stores.
        if dim % 128 != 0:
            m = 128 // math.gcd(dim, 128)
            if batch % m == 0:
                fold = m
        dim2 = dim * fold
        batch2 = batch // fold
        n_row2 = dim2 // k
        # G + E in bf16, double-buffered by BlockSpec.
        const_buffered = 2 * 2 * (dim2 * n_row2 * 2)
        if const_buffered > max_const_buffered_bytes:
            use_matmul_path = False
            fold = 1

    if use_matmul_path:
        x2 = embeddings.reshape(batch2, dim2) if fold > 1 else embeddings
        b_tile = _pick_batch_tile(batch2, dim2 * itemsize, itemsize, target_block_bytes)
        grid = (pl.cdiv(batch2, b_tile),)
        block_bytes = b_tile * dim2 * itemsize

        # VMEM budget: double-buffered in + out blocks, constants, f32
        # intermediates; cap at 56 MiB (8 MiB headroom under v7x's 64 MiB).
        vmem_need = 4 * block_bytes + 4 * b_tile * dim2 * 4 + const_buffered + (2 << 20)
        vmem_limit = int(min(max(vmem_need, 32 << 20), 56 << 20))

        # Skinny gather / broadcast constants in bf16.
        idx = jnp.arange(dim2)
        grp = jnp.arange(n_row2)
        g_mat = (idx[:, None] // k == grp[None, :]).astype(jnp.bfloat16)  # [dim2, n_row2]
        e_mat = (grp[:, None] == idx[None, :] // k).astype(jnp.bfloat16)  # [n_row2, dim2]

        kernel = functools.partial(
            _l1_norm_skinny_kernel, neg_input_possible=neg_input_possible
        )
        out2 = pl.pallas_call(
            kernel,
            out_shape=jax.ShapeDtypeStruct((batch2, dim2), embeddings.dtype),
            grid_spec=pltpu.PrefetchScalarGridSpec(
                num_scalar_prefetch=0,
                grid=grid,
                in_specs=[
                    pl.BlockSpec((b_tile, dim2), lambda b: (b, 0)),
                    pl.BlockSpec((dim2, n_row2), lambda b: (0, 0)),  # grid-invariant
                    pl.BlockSpec((n_row2, dim2), lambda b: (0, 0)),  # grid-invariant
                ],
                out_specs=pl.BlockSpec((b_tile, dim2), lambda b: (b, 0)),
            ),
            compiler_params=pltpu.CompilerParams(
                dimension_semantics=("parallel",),
                vmem_limit_bytes=vmem_limit,
            ),
        )(x2, g_mat, e_mat)
        return out2.reshape(batch, dim) if fold > 1 else out2

    # Fallback: k >= 128 (lane axis already dense) or constants too large for
    # the skinny-matmul trick.  Still batch-tiled, exact f32 reduction.
    x3 = embeddings.reshape(batch, n_row, k)
    b_tile = _pick_batch_tile(batch, n_row * k * itemsize, itemsize, target_block_bytes)
    grid = (pl.cdiv(batch, b_tile),)
    block_bytes = b_tile * dim * itemsize
    vmem_need = 4 * block_bytes + 4 * b_tile * dim * 4 + (2 << 20)
    vmem_limit = int(min(max(vmem_need, 32 << 20), 56 << 20))

    kernel = functools.partial(
        _l1_norm_rowwise_kernel, neg_input_possible=neg_input_possible
    )
    out3 = pl.pallas_call(
        kernel,
        out_shape=jax.ShapeDtypeStruct((batch, n_row, k), embeddings.dtype),
        grid_spec=pltpu.PrefetchScalarGridSpec(
            num_scalar_prefetch=0,
            grid=grid,
            in_specs=[pl.BlockSpec((b_tile, n_row, k), lambda b: (b, 0, 0))],
            out_specs=pl.BlockSpec((b_tile, n_row, k), lambda b: (b, 0, 0)),
        ),
        compiler_params=pltpu.CompilerParams(
            dimension_semantics=("parallel",),
            vmem_limit_bytes=vmem_limit,
        ),
    )(x3)
    return out3.reshape(batch, dim)


def _reference_forward(embeddings, k, neg_input_possible=False):
    batch, dim = embeddings.shape
    n_row = dim // k
    x = embeddings.reshape(batch, n_row, k).astype(jnp.float32)
    if neg_input_possible:
        x = jnp.maximum(x, 0.0)
    denom = jnp.maximum(jnp.sum(jnp.abs(x), axis=-1, keepdims=True), 1e-12)
    return (x / denom).reshape(batch, dim).astype(embeddings.dtype)


if __name__ == "__main__":
    key = jax.random.PRNGKey(0)
    k1, k2, k3 = jax.random.split(key, 3)

    # Primary case (skinny-matmul path with lane-dense fold): small k, dim < 128.
    batch, vector_dim, k = 8, 32, 8
    embeddings = jax.random.normal(k1, (batch, vector_dim), dtype=jnp.float32)
    for neg in (True, False):
        out = jax.block_until_ready(
            matrix_sum_regularizer_forward(embeddings, k, neg_input_possible=neg)
        )
        ref = _reference_forward(embeddings, k, neg_input_possible=neg)
        assert out.shape == (batch, vector_dim)
        # bf16 MXU passes in the denominator -> loosened tolerance (|out| <= 1).
        assert jnp.allclose(out, ref, atol=2e-2, rtol=2e-2), (
            f"mismatch (neg_input_possible={neg})"
        )

    # Lane-aligned case (no fold needed): dim a multiple of 128.
    emb_b = jax.random.normal(k2, (16, 256), dtype=jnp.float32)
    out_b = jax.block_until_ready(
        matrix_sum_regularizer_forward(emb_b, 8, neg_input_possible=True)
    )
    ref_b = _reference_forward(emb_b, 8, neg_input_possible=True)
    assert jnp.allclose(out_b, ref_b, atol=2e-2, rtol=2e-2)

    # Row-wise fallback path: k >= 128 (exact f32 reduction, tight tolerance).
    emb_c = jax.random.normal(k3, (8, 256), dtype=jnp.float32)
    out_c = jax.block_until_ready(
        matrix_sum_regularizer_forward(emb_c, 128, neg_input_possible=False)
    )
    ref_c = _reference_forward(emb_c, 128, neg_input_possible=False)
    assert jnp.allclose(out_c, ref_c, atol=1e-6, rtol=1e-5)

    print("KERNEL_OK")
</pallas_src>

<mosaic_0001>
module attributes {stable_mosaic.version = 11 : i64} {
  func.func @_l1_norm_skinny_kernel(%arg0: i32, %arg1: memref<2x128xf32, #tpu.memory_space<vmem>>, %arg2: memref<128x16xbf16, #tpu.memory_space<vmem>>, %arg3: memref<16x128xbf16, #tpu.memory_space<vmem>>, %arg4: memref<2x128xf32, #tpu.memory_space<vmem>>) attributes {dimension_semantics = [#tpu.dimension_semantics<parallel>], iteration_bounds = array<i64: 1>, scalar_prefetch = 0 : i64, scratch_operands = 0 : i64, tpu.core_type = #tpu.core_type<tc>, window_params = [{transform_indices = @transform_0, window_bounds = array<i64: 2, 128>}, {pipeline_mode = #tpu.pipeline_mode<synchronous>, transform_indices = @transform_1, window_bounds = array<i64: 128, 16>}, {pipeline_mode = #tpu.pipeline_mode<synchronous>, transform_indices = @transform_2, window_bounds = array<i64: 16, 128>}, {transform_indices = @transform_3, window_bounds = array<i64: 2, 128>}]} {
    %c0 = arith.constant 0 : index
    %c0_0 = arith.constant 0 : index
    %0 = vector.load %arg1[%c0, %c0_0] : memref<2x128xf32, #tpu.memory_space<vmem>>, vector<2x128xf32>
    %cst = arith.constant 0.000000e+00 : f32
    %1 = vector.broadcast %cst : f32 to vector<2x128xf32>
    %2 = arith.maximumf %0, %1 : vector<2x128xf32>
    %3 = arith.truncf %2 : vector<2x128xf32> to vector<2x128xbf16>
    %c0_1 = arith.constant 0 : index
    %c0_2 = arith.constant 0 : index
    %4 = vector.load %arg2[%c0_1, %c0_2] : memref<128x16xbf16, #tpu.memory_space<vmem>>, vector<128x16xbf16>
    %cst_3 = arith.constant dense<0.000000e+00> : vector<2x16xf32>
    %5 = tpu.matmul %3, %4, %cst_3 {dimension_numbers = #tpu.dot_dimension_numbers<[1], [0], [0], [1], [0, 0, 1, 1], [], []>} : vector<2x128xbf16>, vector<128x16xbf16>, vector<2x16xf32> -> vector<2x16xf32>
    %cst_4 = arith.constant 9.99999996E-13 : f32
    %6 = vector.broadcast %cst_4 : f32 to vector<2x16xf32>
    %7 = arith.maximumf %5, %6 : vector<2x16xf32>
    %cst_5 = arith.constant 1.000000e+00 : f32
    %8 = vector.broadcast %cst_5 : f32 to vector<2x16xf32>
    %9 = arith.divf %8, %7 : vector<2x16xf32>
    %10 = arith.truncf %9 : vector<2x16xf32> to vector<2x16xbf16>
    %c0_6 = arith.constant 0 : index
    %c0_7 = arith.constant 0 : index
    %11 = vector.load %arg3[%c0_6, %c0_7] : memref<16x128xbf16, #tpu.memory_space<vmem>>, vector<16x128xbf16>
    %cst_8 = arith.constant dense<0.000000e+00> : vector<2x128xf32>
    %12 = tpu.matmul %10, %11, %cst_8 {dimension_numbers = #tpu.dot_dimension_numbers<[1], [0], [0], [1], [0, 0, 1, 1], [], []>} : vector<2x16xbf16>, vector<16x128xbf16>, vector<2x128xf32> -> vector<2x128xf32>
    %13 = arith.mulf %2, %12 : vector<2x128xf32>
    %c0_9 = arith.constant 0 : index
    %c0_10 = arith.constant 0 : index
    %14 = vector.load %arg4[%c0_9, %c0_10] : memref<2x128xf32, #tpu.memory_space<vmem>>, vector<2x128xf32>
    tpu.vector_store %arg4[%c0_9, %c0_10], %13 {strides = array<i32>} : memref<2x128xf32, #tpu.memory_space<vmem>>, vector<2x128xf32>,
    return
  }
  func.func @transform_0(%arg0: i32) -> (i32, i32) {
    %c0_i32 = arith.constant 0 : i32
    %c0_i32_0 = arith.constant 0 : i32
    return %arg0, %c0_i32 : i32, i32
  }
  func.func @transform_1(%arg0: i32) -> (i32, i32) {
    %c0_i32 = arith.constant 0 : i32
    %c0_i32_0 = arith.constant 0 : i32
    %c0_i32_1 = arith.constant 0 : i32
    return %c0_i32, %c0_i32_0 : i32, i32
  }
  func.func @transform_2(%arg0: i32) -> (i32, i32) {
    %c0_i32 = arith.constant 0 : i32
    %c0_i32_0 = arith.constant 0 : i32
    %c0_i32_1 = arith.constant 0 : i32
    return %c0_i32, %c0_i32_0 : i32, i32
  }
  func.func @transform_3(%arg0: i32) -> (i32, i32) {
    %c0_i32 = arith.constant 0 : i32
    %c0_i32_0 = arith.constant 0 : i32
    return %arg0, %c0_i32 : i32, i32
  }
}

</mosaic_0001>

<llo_original>
// kernel: tpu_custom_call.1
$region0: #{tpu_custom_call.1}
  #allocation0 [shape = 'u32[]', space=smem, size = 0x4, offset = 0x4, fixed_abs, tag = 'smem constant byte address 0x4 - core index']
  #allocation1 [shape = 'u32[72,128]{1,0:T(1,128)}', space=vmem, size = 0x9000, scoped, tag = 'internal scratch']
  %s0 = inlined_call_operand.vmem [shape: f32[2,128], index: 0, kind: input, shape index: {}]
  %s1 = inlined_call_operand.vmem [shape: bf16[128,16], index: 1, kind: input, shape index: {}]
  %s2 = inlined_call_operand.vmem [shape: bf16[16,128], index: 2, kind: input, shape index: {}]
  %s3 = inlined_call_operand.hbm [shape: f32[2,128], index: 3, kind: output, shape index: {}]
  %s4 = sld [smem:[#allocation0]]
  $region22: #{tpu_custom_call.1} parent=0
    _
  %s6 = ssub.s32 1, %s4
  %s7 = scalar_select 0, %s6, %s4
  $region1: #{tpu_custom_call.1} parent=0
    #allocation2 [shape = 'u8[1024]{0}', space=vmem, size = 0x400, scoped, tag = 'output window, operand 0, single buffered']
    #allocation3 [shape = 's32[1]{0}', space=sflag, size = 0x4, scoped, tag = 'scoped memory for tpu_custom_call.1']
    %8 = vsyncpa [#allocation3], 0
    // Predicated region
    $region2: #{tpu_custom_call.1} parent=1 // pred_check
      _
    $region3: #{tpu_custom_call.1} parent=1 // pred_check_branch
      %10 = sbr.rel (0) target = $region5
    $region4: #{tpu_custom_call.1} parent=1 // pred_region
      _
    $region5: #{tpu_custom_call.1} parent=1 // pred_fallthru
      _
    // Predicated region
    $region6: #{tpu_custom_call.1} parent=1 // pred_check
      _
    $region7: #{tpu_custom_call.1} parent=1 // pred_check_branch
      %12 = sbr.rel (0) target = $region9
    $region8: #{tpu_custom_call.1} parent=1 // pred_region
      _
    $region9: #{tpu_custom_call.1} parent=1 // pred_fallthru
      _
    // Predicated region
    $region10: #{tpu_custom_call.1} parent=1 // pred_check
      _
    $region11: #{tpu_custom_call.1} parent=1 // pred_check_branch
      %14 = sbr.rel (0) target = $region13
    $region12: #{tpu_custom_call.1} parent=1 // pred_region
      _
    $region13: #{tpu_custom_call.1} parent=1 // pred_fallthru
      _
    %v16 = vld [vmem:[%s0] sm:$0x3]
    %v17 = vmax.f32 %v16, 0.0
    %v18 = vpack.c.bf16 %v17, %v17
    %v19 = vld [vmem:[%s1] sm:$0xf]
    %v20 = vld [vmem:[%s1 + $0x4] sm:$0xf]
    %v21 = vld [vmem:[%s1 + $0x8] sm:$0xf]
    %v22 = vld [vmem:[%s1 + $0xc] sm:$0xf]
    %v23 = vld [vmem:[%s1 + $0x10] sm:$0xf]
    %v24 = vld [vmem:[%s1 + $0x14] sm:$0xf]
    %v25 = vld [vmem:[%s1 + $0x18] sm:$0xf]
    %v26 = vld [vmem:[%s1 + $0x1c] sm:$0xf]
    %v27 = vld [vmem:[%s1 + $0x20] sm:$0xf]
    %v28 = vld [vmem:[%s1 + $0x24] sm:$0xf]
    %v29 = vld [vmem:[%s1 + $0x28] sm:$0xf]
    %v30 = vld [vmem:[%s1 + $0x2c] sm:$0xf]
    %v31 = vld [vmem:[%s1 + $0x30] sm:$0xf]
    %v32 = vld [vmem:[%s1 + $0x34] sm:$0xf]
    %v33 = vld [vmem:[%s1 + $0x38] sm:$0xf]
    %v34 = vld [vmem:[%s1 + $0x3c] sm:$0xf]
    %v51 = vunpack.c.l.b16 %v19
    %v52 = vunpack.c.l.b16 %v20
    %v53 = vunpack.c.l.b16 %v21
    %v54 = vunpack.c.l.b16 %v22
    %v55 = vunpack.c.l.b16 %v23
    %v56 = vunpack.c.l.b16 %v24
    %v57 = vunpack.c.l.b16 %v25
    %v58 = vunpack.c.l.b16 %v26
    %v59 = vunpack.c.l.b16 %v27
    %v60 = vunpack.c.l.b16 %v28
    %v61 = vunpack.c.l.b16 %v29
    %v62 = vunpack.c.l.b16 %v30
    %v63 = vunpack.c.l.b16 %v31
    %v64 = vunpack.c.l.b16 %v32
    %v65 = vunpack.c.l.b16 %v33
    %v66 = vunpack.c.l.b16 %v34
    %v67 = vpack.c.b16 %v52, %v51
    %v68 = vpack.c.b16 %v54, %v53
    %v69 = vpack.c.b16 %v56, %v55
    %v70 = vpack.c.b16 %v58, %v57
    %v71 = vpack.c.b16 %v60, %v59
    %v72 = vpack.c.b16 %v62, %v61
    %v73 = vpack.c.b16 %v64, %v63
    %v74 = vpack.c.b16 %v66, %v65
    %83 = vmatpush.bf16.msra.mxu0 %v74
    %84 = vmatpush.bf16.msra.mxu0 %v73
    %85 = vmatpush.bf16.msra.mxu0 %v72
    %86 = vmatpush.bf16.msra.mxu0 %v71
    %87 = vmatpush.bf16.msra.mxu0 %v70
    %88 = vmatpush.bf16.msra.mxu0 %v69
    %89 = vmatpush.bf16.msra.mxu0 %v68
    %90 = vmatpush.bf16.msra.mxu0 %v67
    %91 = vmatmul.bf16.gmra.mxu0 %v18
    %v92 = vpop.f32.mrf.mxu0
    %v93 = vadd.f32 0.0, %v92
    %v94 = vpop.f32.mrf.mxu0
    %95 = vdwg.mxu0
    %v96 = vmax.f32 %v93, 1e-12
    %v97 = vrcp.pop %v96
    %v98 = vmul.f32 %v96, %v97
    %v99 = vsub.f32 1.0, %v98
    %v100 = vmul.f32 %v97, %v99
    %v101 = vadd.f32 %v97, %v100
    %vm102 = vweird.f32 %v96
    %vm103 = vweird.f32 %v97
    %vm104 = vmor %vm102, %vm103
    %v105 = vsel %vm104, %v97, %v101
    %v106 = vand.u32 2147483647, %v96
    %vm107 = vcmp.eq.f32.partialorder %v106, 8.507059e+37
    %v108 = vand.u32 %v96, 2147483648
    %v109 = vor.u32 1.1754944e-38, %v108
    %v110 = vsel %vm107, %v109, %v105
    %v111 = vmul.f32 1.0, %v110
    %v112 = vpack.c.bf16 %v111, %v111
    %v113 = vld [vmem:[%s2] sm:$0xf]
    %v114 = vld [vmem:[%s2 + $0x4] sm:$0xf]
    %v117 = vunpack.c.l.b16 %v113
    %v118 = vunpack.c.l.b16 %v114
    %v119 = vpack.c.b16 %v118, %v117
    %vm121 = vcmask 130048
    %v123 = vsel %vm121, %v112, 0
    %125 = vmatpush.bf16.msra.mxu0 0
    %126 = vmatpush.bf16.msra.mxu0 0
    %127 = vmatpush.bf16.msra.mxu0 0
    %128 = vmatpush.bf16.msra.mxu0 0
    %129 = vmatpush.bf16.msra.mxu0 0
    %130 = vmatpush.bf16.msra.mxu0 0
    %131 = vmatpush.bf16.msra.mxu0 0
    %132 = vmatpush.bf16.msra.mxu0 %v119
    %133 = vmatmul.bf16.gmra.mxu0 %v123
    %v134 = vpop.f32.mrf.mxu0
    %v135 = vadd.f32 0.0, %v134
    %v136 = vpop.f32.mrf.mxu0
    %137 = vdwg.mxu0
    %v138 = vmul.f32 %v17, %v135
    %139 = vst [vmem:[#allocation2] sm:$0x3] %v138
    // Predicated region
    $region14: #{tpu_custom_call.1} parent=1 // pred_check
      _
    $region15: #{tpu_custom_call.1} parent=1 // pred_check_branch
      %141 = sbr.rel (0) target = $region17
    $region16: #{tpu_custom_call.1} parent=1 // pred_region
      %143 = vsyncadd [#allocation3], 0
      %s145 = sshll.u32 [#allocation2], 4
      %s146 = int_to_ptr.vmem [resolvable:$true] %s145
      %s147 = sshll.u32 %s3, 4
      %s148 = int_to_ptr.hbm [resolvable:$true] %s147
      %150 = dma.vmem_to_hbm [thread:$0]  %s146, 32, %s148, [#allocation3]
    $region17: #{tpu_custom_call.1} parent=1 // pred_fallthru
      _
    // Predicated region
    $region18: #{tpu_custom_call.1} parent=1 // pred_check
      _
    $region19: #{tpu_custom_call.1} parent=1 // pred_check_branch
      %152 = sbr.rel (0) target = $region21
    $region20: #{tpu_custom_call.1} parent=1 // pred_region
      %154 = dma.done [#allocation3], 32
    $region21: #{tpu_custom_call.1} parent=1 // pred_fallthru
      _
    %155 = vsyncpa [#allocation3], 1

</llo_original>
